<compile_context>
chip_gen: v7x
topology: tpu7x:2x2x1
jax: 0.10.0
libtpu: 0.0.40
codegen_flags: <defaults>
</compile_context>

<pallas_src>
import functools

import jax
import jax.numpy as jnp
from jax.experimental import pallas as pl
from jax.experimental.pallas import tpu as pltpu


# ----------------------------- helpers ------------------------------------- #

def _round_up(x, m):
    return (x + m - 1) // m * m


# ----------------------------- Pallas kernel ------------------------------- #

def _text_proj_kernel(h_ref, m_ref, w_ref, b_ref, o_ref, acc_ref):
    # h_ref: (TM, TK) bf16   m_ref: (TM, 1) bf16   w_ref: (TK, DoutP) bf16
    # b_ref: (1, DoutP) f32  o_ref: (TM, DoutP)    acc_ref: (TM, DoutP) f32
    k = pl.program_id(1)

    @pl.when(k == 0)
    def _():
        acc_ref[...] = jnp.zeros_like(acc_ref)

    # Fused attention-mask multiply (VPU work, hidden under the MXU matmul).
    h = h_ref[...] * m_ref[...]
    acc_ref[...] += jnp.dot(h, w_ref[...], preferred_element_type=jnp.float32)

    @pl.when(k == pl.num_programs(1) - 1)
    def _():
        o_ref[...] = (acc_ref[...] + b_ref[...]).astype(o_ref.dtype)


def text_proj_pallas(hidden, mask, weight, bias, *,
                     compute_dtype=jnp.bfloat16, tm_max=512):
    """hidden: (B, L, Din) f32 (pre-mask); mask: (B, L); weight: (Dout, Din);
    bias: (Dout,)  ->  (B, L, Dout) = (hidden * mask) @ W.T + b."""
    B, L, Din = hidden.shape
    Dout = weight.shape[0]
    T = B * L
    out_dtype = hidden.dtype

    # Pad lane dims to multiples of 128 (lane-dense stores, full MXU tiles).
    Din_p = _round_up(Din, 128)
    Dout_p = _round_up(Dout, 128)

    # Row tile: multiple of 8, up to tm_max rows; K tile divides padded Din.
    T8 = _round_up(T, 8)
    TM = min(tm_max, T8)
    T_p = _round_up(T8, TM)
    TK = max(d for d in (512, 256, 128) if Din_p % d == 0)

    # Operand prep (glue): bf16 operands, f32 accumulation inside the kernel.
    h2d = hidden.reshape(T, Din).astype(compute_dtype)
    h2d = jnp.pad(h2d, ((0, T_p - T), (0, Din_p - Din)))
    m2d = mask.reshape(T, 1).astype(compute_dtype)          # 0/1 exact in bf16
    m2d = jnp.pad(m2d, ((0, T_p - T), (0, 0)))
    w_t = weight.T.astype(compute_dtype)                    # (Din, Dout): y = x @ W.T
    w_t = jnp.pad(w_t, ((0, Din_p - Din), (0, Dout_p - Dout)))
    b2d = jnp.pad(bias.reshape(1, Dout).astype(jnp.float32),
                  ((0, 0), (0, Dout_p - Dout)))

    grid = (T_p // TM, Din_p // TK)

    out = pl.pallas_call(
        _text_proj_kernel,
        out_shape=jax.ShapeDtypeStruct((T_p, Dout_p), out_dtype),
        grid=grid,
        in_specs=[
            pl.BlockSpec((TM, TK), lambda i, k: (i, k)),       # activations
            pl.BlockSpec((TM, 1), lambda i, k: (i, 0)),        # attention mask
            pl.BlockSpec((TK, Dout_p), lambda i, k: (k, 0)),   # weight (resident over i)
            pl.BlockSpec((1, Dout_p), lambda i, k: (0, 0)),    # bias (resident)
        ],
        out_specs=pl.BlockSpec((TM, Dout_p), lambda i, k: (i, 0)),
        scratch_shapes=[pltpu.VMEM((TM, Dout_p), jnp.float32)],
        compiler_params=pltpu.CompilerParams(
            dimension_semantics=("parallel", "arbitrary")),
    )(h2d, m2d, w_t, b2d)

    return out[:T, :Dout].reshape(B, L, Dout)


# ------------------------- Synthetic "bert_model" -------------------------- #

def synthetic_bert_hidden(text_ids, emb_table, pos_table):
    """Deterministic stand-in for bert_model(...)[0] BEFORE the mask multiply.
    The mask multiply is fused into the Pallas projection kernel."""
    h = emb_table[text_ids]                              # (B, L, Din) gather
    h = h + pos_table[None, : text_ids.shape[1], :]      # positional offset
    return h


# ------------------------------ TextEncoder -------------------------------- #

class TextEncoderPallas:
    def __init__(self, word_embedding_dim, embedding_dim, vocab_size, max_len, key):
        k_w, k_e, k_p = jax.random.split(key, 3)
        # xavier_normal_ on (Dout, Din) weight: std = sqrt(2 / (fan_in + fan_out))
        std = (2.0 / (word_embedding_dim + embedding_dim)) ** 0.5
        self.proj_weight = std * jax.random.normal(
            k_w, (embedding_dim, word_embedding_dim), dtype=jnp.float32)
        self.proj_bias = jnp.zeros((embedding_dim,), dtype=jnp.float32)  # constant_(bias, 0)
        # synthetic bert parameters (deterministic)
        self.emb_table = 0.02 * jax.random.normal(
            k_e, (vocab_size, word_embedding_dim), dtype=jnp.float32)
        self.pos_table = 0.02 * jax.random.normal(
            k_p, (max_len, word_embedding_dim), dtype=jnp.float32)

    @functools.partial(jax.jit, static_argnums=0)
    def __call__(self, text):
        batch_size, num_words = text.shape
        num_words = num_words // 2
        text_ids = text[:, :num_words]
        text_attmask = text[:, num_words:]
        hidden = synthetic_bert_hidden(text_ids, self.emb_table, self.pos_table)
        # mask multiply is fused into the projection kernel
        return text_proj_pallas(hidden, text_attmask,
                                self.proj_weight, self.proj_bias)


# --------------------------------- main ------------------------------------ #

if __name__ == "__main__":
    key = jax.random.PRNGKey(0)
    k_params, k_ids, k_mask = jax.random.split(key, 3)

    B = 2                 # batch
    L = 8                 # num_words (seq)
    WORD_EMB_DIM = 32     # args.word_embedding_dim
    EMB_DIM = 32          # args.embedding_dim
    VOCAB = 100

    enc = TextEncoderPallas(WORD_EMB_DIM, EMB_DIM, VOCAB, L, k_params)

    ids = jax.random.randint(k_ids, (B, L), 0, VOCAB, dtype=jnp.int32)
    mask = (jax.random.uniform(k_mask, (B, L)) > 0.2).astype(jnp.int32)
    text = jnp.concatenate([ids, mask], axis=1)          # (B, 2*L)

    out = enc(text)
    out = jax.block_until_ready(out)
    assert out.shape == (B, L, EMB_DIM), out.shape

    # Reference check of the Pallas hot path against plain JAX (bf16 operands,
    # f32 accumulation -> compare against a bf16-cast f32 reference).
    hidden_ref = synthetic_bert_hidden(ids, enc.emb_table, enc.pos_table)
    masked_ref = hidden_ref * mask[..., None].astype(jnp.float32)
    h_bf = masked_ref.astype(jnp.bfloat16).astype(jnp.float32)
    w_bf = enc.proj_weight.astype(jnp.bfloat16).astype(jnp.float32)
    ref = h_bf @ w_bf.T + enc.proj_bias
    assert jnp.allclose(out, ref, atol=2e-3, rtol=2e-3), \
        float(jnp.max(jnp.abs(out - ref)))

    print("KERNEL_OK")
</pallas_src>

<mosaic_0001>
module attributes {stable_mosaic.version = 11 : i64} {
  func.func @_text_proj_kernel(%arg0: i32, %arg1: i32, %arg2: memref<16x128xbf16, #tpu.memory_space<vmem>>, %arg3: memref<16x1xbf16, #tpu.memory_space<vmem>>, %arg4: memref<128x128xbf16, #tpu.memory_space<vmem>>, %arg5: memref<1x128xf32, #tpu.memory_space<vmem>>, %arg6: memref<16x128xf32, #tpu.memory_space<vmem>>, %arg7: memref<16x128xf32, #tpu.memory_space<vmem>>) attributes {dimension_semantics = [#tpu.dimension_semantics<parallel>, #tpu.dimension_semantics<arbitrary>], iteration_bounds = array<i64: 1, 1>, scalar_prefetch = 0 : i64, scratch_operands = 1 : i64, tpu.core_type = #tpu.core_type<tc>, window_params = [{transform_indices = @transform_0, window_bounds = array<i64: 16, 128>}, {transform_indices = @transform_1, window_bounds = array<i64: 16, 1>}, {transform_indices = @transform_2, window_bounds = array<i64: 128, 128>}, {pipeline_mode = #tpu.pipeline_mode<synchronous>, transform_indices = @transform_3, window_bounds = array<i64: 1, 128>}, {transform_indices = @transform_4, window_bounds = array<i64: 16, 128>}]} {
    %c0_i32 = arith.constant 0 : i32
    %0 = arith.cmpi eq, %arg1, %c0_i32 : i32
    %1 = arith.extui %0 : i1 to i32
    %c0_i32_0 = arith.constant 0 : i32
    %2 = arith.cmpi ne, %1, %c0_i32_0 : i32
    scf.if %2 {
      %cst_12 = arith.constant 0.000000e+00 : f32
      %15 = vector.broadcast %cst_12 : f32 to vector<16x128xf32>
      %c0_13 = arith.constant 0 : index
      %c0_14 = arith.constant 0 : index
      %16 = vector.load %arg7[%c0_13, %c0_14] : memref<16x128xf32, #tpu.memory_space<vmem>>, vector<16x128xf32>
      tpu.vector_store %arg7[%c0_13, %c0_14], %15 {strides = array<i32>} : memref<16x128xf32, #tpu.memory_space<vmem>>, vector<16x128xf32>,
    } else {
    }
    %c0 = arith.constant 0 : index
    %c0_1 = arith.constant 0 : index
    %3 = vector.load %arg2[%c0, %c0_1] : memref<16x128xbf16, #tpu.memory_space<vmem>>, vector<16x128xbf16>
    %c0_2 = arith.constant 0 : index
    %c0_3 = arith.constant 0 : index
    %4 = vector.load %arg3[%c0_2, %c0_3] : memref<16x1xbf16, #tpu.memory_space<vmem>>, vector<16x1xbf16>
    %5 = vector.broadcast %4 : vector<16x1xbf16> to vector<16x128xbf16>
    %6 = arith.mulf %3, %5 : vector<16x128xbf16>
    %c0_4 = arith.constant 0 : index
    %c0_5 = arith.constant 0 : index
    %7 = vector.load %arg7[%c0_4, %c0_5] : memref<16x128xf32, #tpu.memory_space<vmem>>, vector<16x128xf32>
    %c0_6 = arith.constant 0 : index
    %c0_7 = arith.constant 0 : index
    %8 = vector.load %arg4[%c0_6, %c0_7] : memref<128x128xbf16, #tpu.memory_space<vmem>>, vector<128x128xbf16>
    %cst = arith.constant dense<0.000000e+00> : vector<16x128xf32>
    %9 = tpu.matmul %6, %8, %cst {dimension_numbers = #tpu.dot_dimension_numbers<[1], [0], [0], [1], [0, 0, 1, 1], [], []>} : vector<16x128xbf16>, vector<128x128xbf16>, vector<16x128xf32> -> vector<16x128xf32>
    %10 = arith.addf %7, %9 : vector<16x128xf32>
    %c0_8 = arith.constant 0 : index
    %c0_9 = arith.constant 0 : index
    %11 = vector.load %arg7[%c0_8, %c0_9] : memref<16x128xf32, #tpu.memory_space<vmem>>, vector<16x128xf32>
    tpu.vector_store %arg7[%c0_8, %c0_9], %10 {strides = array<i32>} : memref<16x128xf32, #tpu.memory_space<vmem>>, vector<16x128xf32>,
    %c0_i32_10 = arith.constant 0 : i32
    %12 = arith.cmpi eq, %arg1, %c0_i32_10 : i32
    %13 = arith.extui %12 : i1 to i32
    %c0_i32_11 = arith.constant 0 : i32
    %14 = arith.cmpi ne, %13, %c0_i32_11 : i32
    scf.if %14 {
      %c0_12 = arith.constant 0 : index
      %c0_13 = arith.constant 0 : index
      %15 = vector.load %arg7[%c0_12, %c0_13] : memref<16x128xf32, #tpu.memory_space<vmem>>, vector<16x128xf32>
      %c0_14 = arith.constant 0 : index
      %c0_15 = arith.constant 0 : index
      %16 = vector.load %arg5[%c0_14, %c0_15] : memref<1x128xf32, #tpu.memory_space<vmem>>, vector<1x128xf32>
      %17 = vector.broadcast %16 : vector<1x128xf32> to vector<16x128xf32>
      %18 = arith.addf %15, %17 : vector<16x128xf32>
      %c0_16 = arith.constant 0 : index
      %c0_17 = arith.constant 0 : index
      %19 = vector.load %arg6[%c0_16, %c0_17] : memref<16x128xf32, #tpu.memory_space<vmem>>, vector<16x128xf32>
      tpu.vector_store %arg6[%c0_16, %c0_17], %18 {strides = array<i32>} : memref<16x128xf32, #tpu.memory_space<vmem>>, vector<16x128xf32>,
    } else {
    }
    return
  }
  func.func @transform_0(%arg0: i32, %arg1: i32) -> (i32, i32) {
    %c0_i32 = arith.constant 0 : i32
    return %arg0, %arg1 : i32, i32
  }
  func.func @transform_1(%arg0: i32, %arg1: i32) -> (i32, i32) {
    %c0_i32 = arith.constant 0 : i32
    %c0_i32_0 = arith.constant 0 : i32
    return %arg0, %c0_i32 : i32, i32
  }
  func.func @transform_2(%arg0: i32, %arg1: i32) -> (i32, i32) {
    %c0_i32 = arith.constant 0 : i32
    %c0_i32_0 = arith.constant 0 : i32
    return %arg1, %c0_i32 : i32, i32
  }
  func.func @transform_3(%arg0: i32, %arg1: i32) -> (i32, i32) {
    %c0_i32 = arith.constant 0 : i32
    %c0_i32_0 = arith.constant 0 : i32
    %c0_i32_1 = arith.constant 0 : i32
    return %c0_i32, %c0_i32_0 : i32, i32
  }
  func.func @transform_4(%arg0: i32, %arg1: i32) -> (i32, i32) {
    %c0_i32 = arith.constant 0 : i32
    %c0_i32_0 = arith.constant 0 : i32
    return %arg0, %c0_i32 : i32, i32
  }
}

</mosaic_0001>

<llo_original>
// kernel: a_call__.1
$region0: #{a_call__.1}
  #allocation0 [shape = 'u32[]', space=smem, size = 0x4, offset = 0x4, fixed_abs, tag = 'smem constant byte address 0x4 - core index']
  #allocation1 [shape = 'u32[144,128]{1,0:T(1,128)}', space=vmem, size = 0x12000, scoped, tag = 'internal scratch']
  #allocation2 [shape = 'f32[16,128]{1,0:T(8,128)}', space=vmem, size = 0x2000, scoped, tag = 'scratch operand']
  %s0 = inlined_call_operand.vmem [shape: bf16[16,128], index: 0, kind: input, shape index: {}]
  %s1 = inlined_call_operand.vmem [shape: bf16[16,1], index: 1, kind: input, shape index: {}]
  %s2 = inlined_call_operand.vmem [shape: bf16[128,128], index: 2, kind: input, shape index: {}]
  %s3 = inlined_call_operand.vmem [shape: f32[1,128], index: 3, kind: input, shape index: {}]
  %s4 = inlined_call_operand.vmem [shape: f32[16,128], index: 4, kind: output, shape index: {}]
  %s5 = sld [smem:[#allocation0]]
  $region34: #{a_call__.1} parent=0
    _
  %s7 = ssub.s32 1, %s5
  %s8 = scalar_select 0, %s7, %s5
  // Predicated region
  $region2: #{a_call__.1} parent=0 // pred_check
    _
  $region3: #{a_call__.1} parent=0 // pred_check_branch
    %10 = sbr.rel (0) target = $region5
  $region4: #{a_call__.1} parent=0 // pred_region
    _
  $region5: #{a_call__.1} parent=0 // pred_fallthru
    _
  // Predicated region
  $region6: #{a_call__.1} parent=0 // pred_check
    _
  $region7: #{a_call__.1} parent=0 // pred_check_branch
    %12 = sbr.rel (0) target = $region9
  $region8: #{a_call__.1} parent=0 // pred_region
    _
  $region9: #{a_call__.1} parent=0 // pred_fallthru
    _
  // Predicated region
  $region10: #{a_call__.1} parent=0 // pred_check
    _
  $region11: #{a_call__.1} parent=0 // pred_check_branch
    %14 = sbr.rel (0) target = $region13
  $region12: #{a_call__.1} parent=0 // pred_region
    _
  $region13: #{a_call__.1} parent=0 // pred_fallthru
    _
  // Predicated region
  $region14: #{a_call__.1} parent=0 // pred_check
    _
  $region15: #{a_call__.1} parent=0 // pred_check_branch
    %16 = sbr.rel (0) target = $region17
  $region16: #{a_call__.1} parent=0 // pred_region
    _
  $region17: #{a_call__.1} parent=0 // pred_fallthru
    _
  %p18 = scmp.eq.s32.totalorder 0, 0
  // Predicated region
  $region18: #{a_call__.1} parent=0 // pred_check
    %p19 = pneg %p18
  $region19: #{a_call__.1} parent=0 // pred_check_branch
    %21 = sbr.rel (%p19) target = $region21
  $region20: #{a_call__.1} parent=0 // pred_region
    %22 = vst [vmem:[#allocation2] sm:$0xff] 0.0
    %23 = vst [vmem:[#allocation2 + $0x8] sm:$0xff] 0.0
  $region21: #{a_call__.1} parent=0 // pred_fallthru
    _
  %v24 = vld [vmem:[%s0] sm:$0xf]
  %v25 = vld [vmem:[%s0 + $0x4] sm:$0xf]
  %v26 = vld [vmem:[%s1] sm:$0xf]
  %v27 = vld [vmem:[%s1 + $0x4] sm:$0xf]
  %29 = vset.pattern.permute.xlu0 0
  %30 = vperm.xlu0 %29, %v26
  %v31 = vpop.permute.xlu0 %30
  %v34 = vunpack.c.l.s4 839922192
  %v35 = vunpack.c.0.s8 %v34
  %v36 = vlaneseq
  %v37 = vshrl.u32 %v36, 7
  %v38 = vsub.s32 %v35, %v37
  %v39 = vrot.slane %v31, %v38
  %41 = vset.pattern.permute.xlu0 0
  %42 = vperm.xlu0 %41, %v27
  %v43 = vpop.permute.xlu0 %42
  %v46 = vunpack.c.l.s4 839922192
  %v47 = vunpack.c.0.s8 %v46
  %v48 = vlaneseq
  %v49 = vshrl.u32 %v48, 7
  %v50 = vsub.s32 %v47, %v49
  %v51 = vrot.slane %v43, %v50
  %v52 = vmul.bf16 %v24, %v39
  %v53 = vmul.bf16 %v25, %v51
  %v54 = vld [vmem:[#allocation2] sm:$0xff]
  %v55 = vld [vmem:[#allocation2 + $0x8] sm:$0xff]
  %v56 = vld [vmem:[%s2] sm:$0xf]
  %v57 = vld [vmem:[%s2 + $0x4] sm:$0xf]
  %v58 = vld [vmem:[%s2 + $0x8] sm:$0xf]
  %v59 = vld [vmem:[%s2 + $0xc] sm:$0xf]
  %v60 = vld [vmem:[%s2 + $0x10] sm:$0xf]
  %v61 = vld [vmem:[%s2 + $0x14] sm:$0xf]
  %v62 = vld [vmem:[%s2 + $0x18] sm:$0xf]
  %v63 = vld [vmem:[%s2 + $0x1c] sm:$0xf]
  %v64 = vld [vmem:[%s2 + $0x20] sm:$0xf]
  %v65 = vld [vmem:[%s2 + $0x24] sm:$0xf]
  %v66 = vld [vmem:[%s2 + $0x28] sm:$0xf]
  %v67 = vld [vmem:[%s2 + $0x2c] sm:$0xf]
  %v68 = vld [vmem:[%s2 + $0x30] sm:$0xf]
  %v69 = vld [vmem:[%s2 + $0x34] sm:$0xf]
  %v70 = vld [vmem:[%s2 + $0x38] sm:$0xf]
  %v71 = vld [vmem:[%s2 + $0x3c] sm:$0xf]
  %v74 = vunpack.c.l.b16 %v52
  %v75 = vunpack.c.l.b16 %v53
  %v76 = vpack.c.b16 %v75, %v74
  %v94 = vunpack.c.l.b16 %v56
  %v95 = vunpack.c.l.b16 %v57
  %v96 = vunpack.c.l.b16 %v58
  %v97 = vunpack.c.l.b16 %v59
  %v98 = vunpack.c.l.b16 %v60
  %v99 = vunpack.c.l.b16 %v61
  %v100 = vunpack.c.l.b16 %v62
  %v101 = vunpack.c.l.b16 %v63
  %v102 = vunpack.c.l.b16 %v64
  %v103 = vunpack.c.l.b16 %v65
  %v104 = vunpack.c.l.b16 %v66
  %v105 = vunpack.c.l.b16 %v67
  %v106 = vunpack.c.l.b16 %v68
  %v107 = vunpack.c.l.b16 %v69
  %v108 = vunpack.c.l.b16 %v70
  %v109 = vunpack.c.l.b16 %v71
  %v110 = vpack.c.b16 %v95, %v94
  %v111 = vpack.c.b16 %v97, %v96
  %v112 = vpack.c.b16 %v99, %v98
  %v113 = vpack.c.b16 %v101, %v100
  %v114 = vpack.c.b16 %v103, %v102
  %v115 = vpack.c.b16 %v105, %v104
  %v116 = vpack.c.b16 %v107, %v106
  %v117 = vpack.c.b16 %v109, %v108
  %126 = vmatprep.subr.bf16.mxu0 0
  %127 = vmatpush1.bf16.msra.mxu0 %v110
  %128 = vmatprep.subr.bf16.mxu0 0
  %129 = vmatpush1.bf16.msra.mxu0 %v111
  %130 = vmatprep.subr.bf16.mxu0 0
  %131 = vmatpush1.bf16.msra.mxu0 %v112
  %132 = vmatprep.subr.bf16.mxu0 0
  %133 = vmatpush1.bf16.msra.mxu0 %v113
  %134 = vmatprep.subr.bf16.mxu0 0
  %135 = vmatpush1.bf16.msra.mxu0 %v114
  %136 = vmatprep.subr.bf16.mxu0 0
  %137 = vmatpush1.bf16.msra.mxu0 %v115
  %138 = vmatprep.subr.bf16.mxu0 0
  %139 = vmatpush1.bf16.msra.mxu0 %v116
  %140 = vmatprep.subr.bf16.mxu0 0
  %141 = vmatpush1.bf16.msra.mxu0 %v117
  %142 = vmatprep.subr.bf16.mxu0 0
  %143 = vmatpush1.bf16.msra.mxu0 0
  %144 = vmatprep.subr.bf16.mxu0 0
  %145 = vmatpush1.bf16.msra.mxu0 0
  %146 = vmatprep.subr.bf16.mxu0 0
  %147 = vmatpush1.bf16.msra.mxu0 0
  %148 = vmatprep.subr.bf16.mxu0 0
  %149 = vmatpush1.bf16.msra.mxu0 0
  %150 = vmatprep.subr.bf16.mxu0 0
  %151 = vmatpush1.bf16.msra.mxu0 0
  %152 = vmatprep.subr.bf16.mxu0 0
  %153 = vmatpush1.bf16.msra.mxu0 0
  %154 = vmatprep.subr.bf16.mxu0 0
  %155 = vmatpush1.bf16.msra.mxu0 0
  %156 = vmatprep.subr.bf16.mxu0 0
  %157 = vmatpush1.bf16.msra.mxu0 0
  %158 = vmatprep.mubr.bf16.mxu0 0
  %159 = vmatmul.mubr.bf16.gmra.mrb[0].mxu0 %v76
  %v160 = vpop.f32.mrb[0].mxu0
  %v161 = vadd.f32 0.0, %v160
  %v162 = vpop.f32.mrb[0].mxu0
  %v163 = vpop.f32.mrb[0].mxu0
  %v164 = vadd.f32 0.0, %v163
  %v165 = vpop.f32.mrb[0].mxu0
  %166 = vdwg.mxu0
  %v167 = vadd.f32 %v54, %v161
  %v168 = vadd.f32 %v55, %v164
  %169 = vst [vmem:[#allocation2] sm:$0xff] %v167
  %170 = vst [vmem:[#allocation2 + $0x8] sm:$0xff] %v168
  // Predicated region
  $region22: #{a_call__.1} parent=0 // pred_check
    %p171 = pneg %p18
  $region23: #{a_call__.1} parent=0 // pred_check_branch
    %173 = sbr.rel (%p171) target = $region25
  $region24: #{a_call__.1} parent=0 // pred_region
    %v174 = vld [vmem:[#allocation2] sm:$0xff]
    %v175 = vld [vmem:[#allocation2 + $0x8] sm:$0xff]
    %v176 = vld [vmem:[%s3] sm:$0x1]
    %v178 = vlaneseq
    %v179 = vshrl.u32 %v178, 7
    %v180 = vsub.s32 0, %v179
    %v181 = vrot.slane %v176, %v180
    %v183 = vadd.f32 %v174, %v181
    %v184 = vadd.f32 %v175, %v181
    %185 = vst [vmem:[%s4] sm:$0xff] %v183
    %186 = vst [vmem:[%s4 + $0x8] sm:$0xff] %v184
  $region25: #{a_call__.1} parent=0 // pred_fallthru
    _
  // Predicated region
  $region26: #{a_call__.1} parent=0 // pred_check
    _
  $region27: #{a_call__.1} parent=0 // pred_check_branch
    %188 = sbr.rel (0) target = $region29
  $region28: #{a_call__.1} parent=0 // pred_region
    _
  $region29: #{a_call__.1} parent=0 // pred_fallthru
    _
  // Predicated region
  $region30: #{a_call__.1} parent=0 // pred_check
    _
  $region31: #{a_call__.1} parent=0 // pred_check_branch
    %190 = sbr.rel (0) target = $region33
  $region32: #{a_call__.1} parent=0 // pred_region
    _
  $region33: #{a_call__.1} parent=0 // pred_fallthru
    _

</llo_original>
